<compile_context>
chip_gen: v7x
topology: tpu7x:2x2x1
jax: 0.10.0
libtpu: 0.0.40
codegen_flags: <defaults>
</compile_context>

<pallas_src>
import jax
import jax.numpy as jnp
from jax.experimental import pallas as pl
from jax.experimental.pallas import tpu as pltpu


def _rmsnorm_kernel(eps: float):
    # eps is a plain Python float -> lowered as an inline literal (no captured
    # jax-array constants, which pallas_call rejects).
    def kernel(x_ref, w_ref, o_ref):
        x = x_ref[...]                                    # (TR, H), input dtype
        xf = x.astype(jnp.float32)
        var = jnp.mean(xf * xf, axis=-1, keepdims=True)   # fp32 mean over hidden (XLU)
        normed = xf * jax.lax.rsqrt(var + eps)            # fp32 (rsqrt -> EUP slot)
        # cast back to input dtype, then scale by weight (matches PyTorch order)
        o_ref[...] = (w_ref[...] * normed.astype(x.dtype)).astype(o_ref.dtype)
    return kernel


def _pick_row_tile(rows: int, hidden: int, itemsize: int) -> int:
    """Largest 16-multiple row tile that keeps the per-step VMEM footprint
    within budget (double-buffered in + out tiles plus fp32 intermediates),
    conservative enough for v7x's 64 MiB VMEM, while keeping enough grid steps
    for megacore sharding."""
    VMEM_BUDGET = 32 * 1024 * 1024
    # 2x double-buffered (in + out) tiles at `itemsize` bytes + ~8 B/elem of
    # fp32 intermediates (xf, normed) the body materializes.
    bytes_per_elem = 4 * itemsize + 8
    tr = VMEM_BUDGET // max(1, hidden * bytes_per_elem)
    tr = (tr // 16) * 16
    tr = max(16, min(tr, 1024))
    # never bigger than needed to cover all rows (rounded up to sublane packing)
    rows_up = ((rows + 15) // 16) * 16
    tr = min(tr, rows_up)
    # keep >= ~8 grid steps when the problem is big enough so both v7x
    # TensorCores get work under dimension_semantics=("parallel",)
    if rows >= 8 * 16:
        tr = min(tr, max(16, (((rows + 7) // 8) // 16) * 16))
    return tr


def quant_rmsnorm(x, weight, eps=1e-6, *, row_tile=None):
    """x: (..., hidden), weight: (hidden,). Returns same shape/dtype as x."""
    eps = float(eps)
    orig_shape = x.shape
    hidden = orig_shape[-1]
    rows = 1
    for d in orig_shape[:-1]:
        rows *= d
    x2d = x.reshape(rows, hidden)
    w2d = weight.reshape(1, hidden).astype(x.dtype)

    itemsize = jnp.dtype(x.dtype).itemsize
    tr = row_tile if row_tile is not None else _pick_row_tile(rows, hidden, itemsize)

    # Ragged row counts: cdiv grid; Pallas masks the partial tail block
    # (no more "whole array in one block" fallback).
    grid = (pl.cdiv(rows, tr),)

    # Explicit scoped-VMEM limit sized to the double-buffered tile footprint,
    # capped well under v7x's 64 MiB physical VMEM.
    tile_bytes = tr * hidden * (4 * itemsize + 8)
    vmem_limit = int(min(48 * 1024 * 1024, max(32 * 1024 * 1024, 2 * tile_bytes)))

    # TODO(synk): for hidden < 128 (toy shapes) output stores are masked
    # partial vst; a lane-dense repack would help but is unnecessary for
    # production hidden sizes (multiples of 128).
    out = pl.pallas_call(
        _rmsnorm_kernel(eps),
        out_shape=jax.ShapeDtypeStruct((rows, hidden), x.dtype),
        grid_spec=pl.GridSpec(
            grid=grid,
            in_specs=[
                pl.BlockSpec((tr, hidden), lambda i: (i, 0)),
                # constant block index -> weight stays resident across steps
                pl.BlockSpec((1, hidden), lambda i: (0, 0)),
            ],
            out_specs=pl.BlockSpec((tr, hidden), lambda i: (i, 0)),
        ),
        compiler_params=pltpu.CompilerParams(
            dimension_semantics=("parallel",),
            vmem_limit_bytes=vmem_limit,
        ),
    )(x2d, w2d)
    return out.reshape(orig_shape)


if __name__ == "__main__":
    # small shapes consistent with an RMSNorm over a transformer hidden dim
    batch, seq, hidden = 2, 8, 32
    eps = 1e-6

    key = jax.random.PRNGKey(0)
    kx, kw = jax.random.split(key)
    x = jax.random.normal(kx, (batch, seq, hidden), dtype=jnp.float32).astype(jnp.bfloat16)
    # deterministic weight init (stand-in for ori_norm.weight buffer)
    weight = (1.0 + 0.01 * jax.random.normal(kw, (hidden,), dtype=jnp.float32)).astype(jnp.bfloat16)

    out = quant_rmsnorm(x, weight, eps)
    out = jax.block_until_ready(out)

    # pure-JAX reference mirroring the PyTorch forward
    xf = x.astype(jnp.float32)
    var = jnp.mean(xf * xf, axis=-1, keepdims=True)
    ref = (weight * (xf * jax.lax.rsqrt(var + eps)).astype(x.dtype)).astype(x.dtype)

    assert out.shape == x.shape and out.dtype == x.dtype
    assert jnp.allclose(out.astype(jnp.float32), ref.astype(jnp.float32),
                        atol=1e-2, rtol=1e-2)
    print("KERNEL_OK")
</pallas_src>

<mosaic_0001>
module attributes {stable_mosaic.version = 11 : i64} {
  func.func @kernel(%arg0: i32, %arg1: memref<16x32xbf16, #tpu.memory_space<vmem>>, %arg2: memref<1x32xbf16, #tpu.memory_space<vmem>>, %arg3: memref<16x32xbf16, #tpu.memory_space<vmem>>) attributes {dimension_semantics = [#tpu.dimension_semantics<parallel>], iteration_bounds = array<i64: 1>, scalar_prefetch = 0 : i64, scratch_operands = 0 : i64, tpu.core_type = #tpu.core_type<tc>, window_params = [{transform_indices = @transform_0, window_bounds = array<i64: 16, 32>}, {pipeline_mode = #tpu.pipeline_mode<synchronous>, transform_indices = @transform_1, window_bounds = array<i64: 1, 32>}, {transform_indices = @transform_2, window_bounds = array<i64: 16, 32>}]} {
    %c0 = arith.constant 0 : index
    %c0_0 = arith.constant 0 : index
    %0 = vector.load %arg1[%c0, %c0_0] : memref<16x32xbf16, #tpu.memory_space<vmem>>, vector<16x32xbf16>
    %1 = arith.extf %0 : vector<16x32xbf16> to vector<16x32xf32>
    %2 = arith.mulf %1, %1 : vector<16x32xf32>
    %cst = arith.constant dense<0.000000e+00> : vector<16xf32>
    %3 = vector.multi_reduction <add>, %2, %cst [1] : vector<16x32xf32> to vector<16xf32>
    %4 = vector.shape_cast %3 : vector<16xf32> to vector<16x1xf32>
    %cst_1 = arith.constant 3.200000e+01 : f32
    %5 = vector.broadcast %cst_1 : f32 to vector<16x1xf32>
    %6 = arith.divf %4, %5 : vector<16x1xf32>
    %cst_2 = arith.constant 9.99999997E-7 : f32
    %7 = vector.broadcast %cst_2 : f32 to vector<16x1xf32>
    %8 = arith.addf %6, %7 : vector<16x1xf32>
    %9 = math.rsqrt %8 : vector<16x1xf32>
    %10 = vector.broadcast %9 : vector<16x1xf32> to vector<16x32xf32>
    %11 = arith.mulf %1, %10 : vector<16x32xf32>
    %c0_3 = arith.constant 0 : index
    %c0_4 = arith.constant 0 : index
    %12 = vector.load %arg2[%c0_3, %c0_4] : memref<1x32xbf16, #tpu.memory_space<vmem>>, vector<1x32xbf16>
    %13 = arith.truncf %11 : vector<16x32xf32> to vector<16x32xbf16>
    %14 = vector.broadcast %12 : vector<1x32xbf16> to vector<16x32xbf16>
    %15 = arith.mulf %14, %13 : vector<16x32xbf16>
    %c0_5 = arith.constant 0 : index
    %c0_6 = arith.constant 0 : index
    %16 = vector.load %arg3[%c0_5, %c0_6] : memref<16x32xbf16, #tpu.memory_space<vmem>>, vector<16x32xbf16>
    tpu.vector_store %arg3[%c0_5, %c0_6], %15 {strides = array<i32>} : memref<16x32xbf16, #tpu.memory_space<vmem>>, vector<16x32xbf16>,
    return
  }
  func.func @transform_0(%arg0: i32) -> (i32, i32) {
    %c0_i32 = arith.constant 0 : i32
    %c0_i32_0 = arith.constant 0 : i32
    return %arg0, %c0_i32 : i32, i32
  }
  func.func @transform_1(%arg0: i32) -> (i32, i32) {
    %c0_i32 = arith.constant 0 : i32
    %c0_i32_0 = arith.constant 0 : i32
    %c0_i32_1 = arith.constant 0 : i32
    return %c0_i32, %c0_i32_0 : i32, i32
  }
  func.func @transform_2(%arg0: i32) -> (i32, i32) {
    %c0_i32 = arith.constant 0 : i32
    %c0_i32_0 = arith.constant 0 : i32
    return %arg0, %c0_i32 : i32, i32
  }
}

</mosaic_0001>

<llo_original>
// kernel: tpu_custom_call.1
$region0: #{tpu_custom_call.1}
  #allocation0 [shape = 'u32[]', space=smem, size = 0x4, offset = 0x4, fixed_abs, tag = 'smem constant byte address 0x4 - core index']
  #allocation1 [shape = 'u32[144,128]{1,0:T(1,128)}', space=vmem, size = 0x12000, scoped, tag = 'internal scratch']
  %s0 = inlined_call_operand.hbm [shape: bf16[16,32], index: 0, kind: input, shape index: {}]
  %s1 = inlined_call_operand.vmem [shape: bf16[1,32], index: 1, kind: input, shape index: {}]
  %s2 = inlined_call_operand.hbm [shape: bf16[16,32], index: 2, kind: output, shape index: {}]
  %s3 = sld [smem:[#allocation0]]
  $region22: #{tpu_custom_call.1} parent=0
    _
  %s5 = ssub.s32 1, %s3
  %s6 = scalar_select 0, %s5, %s3
  $region1: #{tpu_custom_call.1} parent=0
    #allocation2 [shape = 'u8[4096]{0}', space=vmem, size = 0x1000, scoped, tag = 'input window, operand 0, single buffered']
    #allocation3 [shape = 's32[1]{0}', space=sflag, size = 0x4, scoped, tag = 'scoped memory for tpu_custom_call.1']
    #allocation4 [shape = 's32[1]{0}', space=sflag, size = 0x4, scoped, tag = 'scoped memory for tpu_custom_call.1']
    #allocation5 [shape = 'u8[4096]{0}', space=vmem, size = 0x1000, scoped, tag = 'output window, operand 0, single buffered']
    %7 = vsyncpa [#allocation3], 0
    %8 = vsyncpa [#allocation4], 0
    // Predicated region
    $region2: #{tpu_custom_call.1} parent=1 // pred_check
      _
    $region3: #{tpu_custom_call.1} parent=1 // pred_check_branch
      %10 = sbr.rel (0) target = $region5
    $region4: #{tpu_custom_call.1} parent=1 // pred_region
      %s12 = ssub.s32 128, 128
      %13 = vsyncadd [#allocation3], %s12
      %s14 = sshll.u32 [#allocation2], 4
      %s15 = int_to_ptr.vmem [resolvable:$true] %s14
      %20 = dma.hbm_to_vmem [thread:$0]  %s0, 128, %s15, [#allocation3], 64, 64, 4
    $region5: #{tpu_custom_call.1} parent=1 // pred_fallthru
      _
    // Predicated region
    $region6: #{tpu_custom_call.1} parent=1 // pred_check
      _
    $region7: #{tpu_custom_call.1} parent=1 // pred_check_branch
      %22 = sbr.rel (0) target = $region9
    $region8: #{tpu_custom_call.1} parent=1 // pred_region
      _
    $region9: #{tpu_custom_call.1} parent=1 // pred_fallthru
      _
    // Predicated region
    $region10: #{tpu_custom_call.1} parent=1 // pred_check
      _
    $region11: #{tpu_custom_call.1} parent=1 // pred_check_branch
      %24 = sbr.rel (0) target = $region13
    $region12: #{tpu_custom_call.1} parent=1 // pred_region
      %25 = dma.done [#allocation3], 128
    $region13: #{tpu_custom_call.1} parent=1 // pred_fallthru
      _
    %v26 = vld [vmem:[#allocation2] sm:$0xf]
    %v27 = vld [vmem:[#allocation2 + $0x4] sm:$0xf]
    %v28 = vunpack.c.l.bf16 %v26
    %v29 = vunpack.c.l.bf16 %v27
    %v30 = vmul.f32 %v28, %v28
    %v31 = vmul.f32 %v29, %v29
    %vm32 = vcmask 261120
    %v33 = vsel %vm32, %v30, 0.0
    %34 = vadd.xlane.f32.xlu0 %v33
    %v35 = vpop.xlane.xlu0 %34
    %v36 = vsel %vm32, %v31, 0.0
    %37 = vadd.xlane.f32.xlu0 %v36
    %v38 = vpop.xlane.xlu0 %37
    %v39 = vrcp.pop 32.0
    %v40 = vmul.f32 %v35, %v39
    %v41 = vmul.f32 %v38, %v39
    %v42 = vadd.f32 %v40, 1e-06
    %v43 = vadd.f32 %v41, 1e-06
    %v44 = vrsqrt.pop %v42
    %v45 = vrsqrt.pop %v43
    %v46 = vmul.f32 %v28, %v44
    %v47 = vmul.f32 %v29, %v45
    %v48 = vld [vmem:[%s1] sm:$0x1]
    %v49 = vpack.c.bf16 %v47, %v46
    %v51 = vpack.i.b16 %v48, %v48
    %v53 = vlaneseq
    %v54 = vshrl.u32 %v53, 7
    %v55 = vsub.s32 0, %v54
    %v56 = vrot.slane %v51, %v55
    %v57 = vmul.bf16 %v56, %v49
    %v59 = vunpack.c.l.b16 %v57
    %v60 = vunpack.c.h.b16 %v57
    %v61 = vpack.c.b16 %v59, %v59
    %v62 = vpack.c.b16 %v60, %v60
    %vm65 = vcmask 257024
    %66 = vst.msk [vmem:[#allocation5] sm:$0xf] %vm65, %v61
    %67 = vst.msk [vmem:[#allocation5 + $0x4] sm:$0xf] %vm65, %v62
    // Predicated region
    $region14: #{tpu_custom_call.1} parent=1 // pred_check
      _
    $region15: #{tpu_custom_call.1} parent=1 // pred_check_branch
      %69 = sbr.rel (0) target = $region17
    $region16: #{tpu_custom_call.1} parent=1 // pred_region
      %s71 = ssub.s32 128, 128
      %72 = vsyncadd [#allocation4], %s71
      %s73 = sshll.u32 [#allocation5], 4
      %s74 = int_to_ptr.vmem [resolvable:$true] %s73
      %79 = dma.vmem_to_hbm [thread:$0]  %s74, 128, %s2, [#allocation4], 64, 64, 4
    $region17: #{tpu_custom_call.1} parent=1 // pred_fallthru
      _
    // Predicated region
    $region18: #{tpu_custom_call.1} parent=1 // pred_check
      _
    $region19: #{tpu_custom_call.1} parent=1 // pred_check_branch
      %81 = sbr.rel (0) target = $region21
    $region20: #{tpu_custom_call.1} parent=1 // pred_region
      %82 = dma.done [#allocation4], 128
    $region21: #{tpu_custom_call.1} parent=1 // pred_fallthru
      _
    %83 = vsyncpa [#allocation3], 1
    %84 = vsyncpa [#allocation4], 1

</llo_original>
